<compile_context>
chip_gen: v7x
topology: tpu7x:2x2x1
jax: 0.10.0
libtpu: 0.0.40
codegen_flags: <defaults>
</compile_context>

<pallas_src>
import jax
import jax.numpy as jnp
from jax.experimental import pallas as pl
from jax.experimental.pallas import tpu as pltpu


def _default_rope_init(head_dim: int, rope_theta: float):
    """ROPE_INIT_FUNCTIONS['default'] equivalent."""
    inv_freq = 1.0 / (
        rope_theta ** (jnp.arange(0, head_dim, 2, dtype=jnp.float32) / head_dim)
    )
    attention_scaling = 1.0
    return inv_freq, attention_scaling


_ROW_TILE = 2048  # rows per block; 2048 * 128 * 4 B = 1 MiB/output block (f32, D=128)


def _make_kernel(attention_scaling: float, duplicate_halves: bool):
    def kernel(pos_ref, invf_ref, cos_ref, sin_ref):
        # pos_ref:  (TS, 1)  int32 positions (cast to f32 here; free under EUP/store)
        # invf_ref: (1, Dk)  f32; Dk = D/2 (unique cols) if duplicate_halves else D
        # cos_ref:  (TS, D)  out
        # sin_ref:  (TS, D)  out
        pos = pos_ref[...].astype(jnp.float32)          # (TS, 1)
        invf = invf_ref[...]                            # (1, Dk)
        ang = pos * invf                                 # (TS, Dk) VPU broadcast mul
        c = jnp.cos(ang)                                 # EUP
        s = jnp.sin(ang)                                 # EUP
        if attention_scaling != 1.0:                     # skip when == 1.0 (default rope)
            c = c * attention_scaling
            s = s * attention_scaling
        c = c.astype(cos_ref.dtype)
        s = s.astype(sin_ref.dtype)
        if duplicate_halves:
            half = invf_ref.shape[-1]                    # multiple of 128: aligned stores
            cos_ref[:, :half] = c
            cos_ref[:, half:] = c
            sin_ref[:, :half] = s
            sin_ref[:, half:] = s
        else:
            cos_ref[...] = c                             # single full-width store
            sin_ref[...] = s

    return kernel


def granite_rotary_embedding(x, position_ids, inv_freq, attention_scaling):
    """
    x:            only its dtype is used (matches PyTorch semantics)
    position_ids: [B, S] integer positions
    inv_freq:     [D/2] float32
    returns (cos, sin) each [B, S, D] in x.dtype
    """
    B, S = position_ids.shape
    half = inv_freq.shape[0]
    D = 2 * half
    out_dtype = x.dtype
    rows = B * S

    # Fixed row tile; if everything fits in one tile use the full extent
    # (block dim == full array dim is always legal regardless of alignment).
    TS = rows if rows <= _ROW_TILE else _ROW_TILE
    n_blocks = pl.cdiv(rows, TS)

    # Compute cos/sin on the unique D/2 columns only when both halves are
    # 128-lane aligned; otherwise fold cat(freqs, freqs) into a duplicated
    # inv_freq so the kernel does single full-width stores.
    duplicate_halves = (half % 128 == 0)
    if duplicate_halves:
        invf_arr = inv_freq.astype(jnp.float32).reshape(1, half)
    else:
        invf_arr = jnp.concatenate([inv_freq, inv_freq], axis=0).astype(
            jnp.float32).reshape(1, D)

    # int32 positions, flattened to (rows, 1); float cast happens in-kernel.
    # (f32 matches the PyTorch .float() path; positions > 2^24 lose exactness.)
    pos2 = position_ids.astype(jnp.int32).reshape(rows, 1)

    kernel = _make_kernel(float(attention_scaling), duplicate_halves)

    out_bytes = jnp.dtype(out_dtype).itemsize
    cost = pl.CostEstimate(
        flops=rows * D,
        transcendentals=2 * rows * D,
        bytes_accessed=rows * 4 + int(invf_arr.size) * 4 + 2 * rows * D * out_bytes,
    )

    cos, sin = pl.pallas_call(
        kernel,
        out_shape=(
            jax.ShapeDtypeStruct((rows, D), out_dtype),
            jax.ShapeDtypeStruct((rows, D), out_dtype),
        ),
        grid_spec=pltpu.PrefetchScalarGridSpec(
            num_scalar_prefetch=0,
            grid=(n_blocks,),
            in_specs=[
                pl.BlockSpec((TS, 1), lambda i: (i, 0)),
                pl.BlockSpec((1, invf_arr.shape[-1]), lambda i: (0, 0)),
            ],
            out_specs=[
                pl.BlockSpec((TS, D), lambda i: (i, 0)),
                pl.BlockSpec((TS, D), lambda i: (i, 0)),
            ],
        ),
        compiler_params=pltpu.CompilerParams(
            dimension_semantics=("parallel",),
        ),
        cost_estimate=cost,
    )(pos2, invf_arr)

    # Metadata-only reshapes (row-major contiguous): no HBM traffic.
    return cos.reshape(B, S, D), sin.reshape(B, S, D)


def granite_rotary_embedding_ref(x, position_ids, inv_freq, attention_scaling):
    """Pure-JAX reference mirroring the PyTorch forward exactly."""
    inv_freq_expanded = inv_freq[None, :, None].astype(jnp.float32)
    inv_freq_expanded = jnp.broadcast_to(
        inv_freq_expanded, (position_ids.shape[0], inv_freq.shape[0], 1)
    )
    position_ids_expanded = position_ids[:, None, :].astype(jnp.float32)
    freqs = jnp.matmul(inv_freq_expanded, position_ids_expanded).transpose(0, 2, 1)
    emb = jnp.concatenate((freqs, freqs), axis=-1)
    cos = jnp.cos(emb) * attention_scaling
    sin = jnp.sin(emb) * attention_scaling
    return cos.astype(x.dtype), sin.astype(x.dtype)


if __name__ == "__main__":
    # Small synthetic "config": hidden=64, num_attention_heads=2 -> head_dim=32
    head_dim = 32
    rope_theta = 10000.0
    max_position_embeddings = 128

    inv_freq, attention_scaling = _default_rope_init(head_dim, rope_theta)

    key = jax.random.PRNGKey(0)
    kx, kp = jax.random.split(key)

    B, S, H = 2, 8, 64
    # x only contributes its dtype to the output (as in the PyTorch module)
    x = jax.random.normal(kx, (B, S, H), dtype=jnp.float32)
    position_ids = jax.random.randint(
        kp, (B, S), 0, max_position_embeddings, dtype=jnp.int32
    )

    cos, sin = granite_rotary_embedding(x, position_ids, inv_freq, attention_scaling)
    cos, sin = jax.block_until_ready((cos, sin))

    cos_ref, sin_ref = granite_rotary_embedding_ref(
        x, position_ids, inv_freq, attention_scaling
    )

    assert cos.shape == (B, S, head_dim) and sin.shape == (B, S, head_dim)
    assert cos.dtype == x.dtype and sin.dtype == x.dtype
    assert jnp.allclose(cos, cos_ref, atol=1e-5, rtol=1e-5)
    assert jnp.allclose(sin, sin_ref, atol=1e-5, rtol=1e-5)

    print("KERNEL_OK")
</pallas_src>

<mosaic_0001>
module attributes {stable_mosaic.version = 11 : i64} {
  func.func @kernel(%arg0: i32, %arg1: memref<16x1xi32, #tpu.memory_space<vmem>>, %arg2: memref<1x32xf32, #tpu.memory_space<vmem>>, %arg3: memref<16x32xf32, #tpu.memory_space<vmem>>, %arg4: memref<16x32xf32, #tpu.memory_space<vmem>>) attributes {dimension_semantics = [#tpu.dimension_semantics<parallel>], iteration_bounds = array<i64: 1>, scalar_prefetch = 0 : i64, scratch_operands = 0 : i64, tpu.core_type = #tpu.core_type<tc>, window_params = [{transform_indices = @transform_0, window_bounds = array<i64: 16, 1>}, {pipeline_mode = #tpu.pipeline_mode<synchronous>, transform_indices = @transform_1, window_bounds = array<i64: 1, 32>}, {transform_indices = @transform_2, window_bounds = array<i64: 16, 32>}, {transform_indices = @transform_3, window_bounds = array<i64: 16, 32>}]} {
    %c0 = arith.constant 0 : index
    %c0_0 = arith.constant 0 : index
    %0 = vector.load %arg1[%c0, %c0_0] : memref<16x1xi32, #tpu.memory_space<vmem>>, vector<16x1xi32>
    %1 = arith.sitofp %0 : vector<16x1xi32> to vector<16x1xf32>
    %c0_1 = arith.constant 0 : index
    %c0_2 = arith.constant 0 : index
    %2 = vector.load %arg2[%c0_1, %c0_2] : memref<1x32xf32, #tpu.memory_space<vmem>>, vector<1x32xf32>
    %3 = vector.broadcast %1 : vector<16x1xf32> to vector<16x32xf32>
    %4 = vector.broadcast %2 : vector<1x32xf32> to vector<16x32xf32>
    %5 = arith.mulf %3, %4 : vector<16x32xf32>
    %6 = math.cos %5 : vector<16x32xf32>
    %7 = math.sin %5 : vector<16x32xf32>
    %c0_3 = arith.constant 0 : index
    %c0_4 = arith.constant 0 : index
    %8 = vector.load %arg3[%c0_3, %c0_4] : memref<16x32xf32, #tpu.memory_space<vmem>>, vector<16x32xf32>
    tpu.vector_store %arg3[%c0_3, %c0_4], %6 {strides = array<i32>} : memref<16x32xf32, #tpu.memory_space<vmem>>, vector<16x32xf32>,
    %c0_5 = arith.constant 0 : index
    %c0_6 = arith.constant 0 : index
    %9 = vector.load %arg4[%c0_5, %c0_6] : memref<16x32xf32, #tpu.memory_space<vmem>>, vector<16x32xf32>
    tpu.vector_store %arg4[%c0_5, %c0_6], %7 {strides = array<i32>} : memref<16x32xf32, #tpu.memory_space<vmem>>, vector<16x32xf32>,
    return
  }
  func.func @transform_0(%arg0: i32) -> (i32, i32) {
    %c0_i32 = arith.constant 0 : i32
    %c0_i32_0 = arith.constant 0 : i32
    return %arg0, %c0_i32 : i32, i32
  }
  func.func @transform_1(%arg0: i32) -> (i32, i32) {
    %c0_i32 = arith.constant 0 : i32
    %c0_i32_0 = arith.constant 0 : i32
    %c0_i32_1 = arith.constant 0 : i32
    return %c0_i32, %c0_i32_0 : i32, i32
  }
  func.func @transform_2(%arg0: i32) -> (i32, i32) {
    %c0_i32 = arith.constant 0 : i32
    %c0_i32_0 = arith.constant 0 : i32
    return %arg0, %c0_i32 : i32, i32
  }
  func.func @transform_3(%arg0: i32) -> (i32, i32) {
    %c0_i32 = arith.constant 0 : i32
    %c0_i32_0 = arith.constant 0 : i32
    return %arg0, %c0_i32 : i32, i32
  }
}

</mosaic_0001>

<llo_original>
// kernel: tpu_custom_call.1
$region0: #{tpu_custom_call.1}
  #allocation0 [shape = 'u32[]', space=smem, size = 0x4, offset = 0x4, fixed_abs, tag = 'smem constant byte address 0x4 - core index']
  #allocation1 [shape = 'u32[144,128]{1,0:T(1,128)}', space=vmem, size = 0x12000, scoped, tag = 'internal scratch']
  %s0 = inlined_call_operand.vmem [shape: s32[16,1], index: 0, kind: input, shape index: {}]
  %s1 = inlined_call_operand.vmem [shape: f32[1,32], index: 1, kind: input, shape index: {}]
  %s2 = inlined_call_operand.hbm [shape: f32[16,32], index: 2, kind: output, shape index: {0}]
  %s3 = inlined_call_operand.hbm [shape: f32[16,32], index: 3, kind: output, shape index: {1}]
  %4 = xla_tuple %s2, %s3
  %s5 = sld [smem:[#allocation0]]
  $region26: #{tpu_custom_call.1} parent=0
    _
  %s7 = ssub.s32 1, %s5
  %s8 = scalar_select 0, %s7, %s5
  $region1: #{tpu_custom_call.1} parent=0
    #allocation2 [shape = 'u8[8192]{0}', space=vmem, size = 0x2000, scoped, tag = 'output window, operand 0, single buffered']
    #allocation3 [shape = 's32[1]{0}', space=sflag, size = 0x4, scoped, tag = 'scoped memory for tpu_custom_call.1']
    #allocation4 [shape = 'u8[8192]{0}', space=vmem, size = 0x2000, scoped, tag = 'output window, operand 1, single buffered']
    #allocation5 [shape = 's32[1]{0}', space=sflag, size = 0x4, scoped, tag = 'scoped memory for tpu_custom_call.1']
    %9 = vsyncpa [#allocation3], 0
    %10 = vsyncpa [#allocation5], 0
    // Predicated region
    $region2: #{tpu_custom_call.1} parent=1 // pred_check
      _
    $region3: #{tpu_custom_call.1} parent=1 // pred_check_branch
      %12 = sbr.rel (0) target = $region5
    $region4: #{tpu_custom_call.1} parent=1 // pred_region
      _
    $region5: #{tpu_custom_call.1} parent=1 // pred_fallthru
      _
    // Predicated region
    $region6: #{tpu_custom_call.1} parent=1 // pred_check
      _
    $region7: #{tpu_custom_call.1} parent=1 // pred_check_branch
      %14 = sbr.rel (0) target = $region9
    $region8: #{tpu_custom_call.1} parent=1 // pred_region
      _
    $region9: #{tpu_custom_call.1} parent=1 // pred_fallthru
      _
    %v15 = vld [vmem:[%s0] sm:$0xff]
    %v16 = vld [vmem:[%s0 + $0x8] sm:$0xff]
    %v17 = vcvt.s32.f32 %v15
    %v18 = vcvt.s32.f32 %v16
    %v19 = vld [vmem:[%s1] sm:$0x1]
    %21 = vset.pattern.permute.xlu0 0
    %22 = vperm.xlu0 %21, %v17
    %v23 = vpop.permute.xlu0 %22
    %26 = vset.pattern.permute.xlu0 0
    %27 = vperm.xlu0 %26, %v18
    %v28 = vpop.permute.xlu0 %27
    %v31 = vlaneseq
    %v32 = vshrl.u32 %v31, 7
    %v33 = vsub.s32 0, %v32
    %v34 = vrot.slane %v19, %v33
    %v36 = vmul.f32 %v23, %v34
    %v37 = vmul.f32 %v28, %v34
    %v38 = vand.u32 2147483647, %v36
    %vm39 = vcmp.le.f32.partialorder %v38, 0.7853982
    %vm40 = vcmp.lt.s32.totalorder %v36, 0
    %v41 = vand.u32 %v36, 2139095040
    %v42 = vshrl.u32 %v41, 23
    %v43 = vsub.s32 %v42, 127
    %v44 = vand.u32 2147483647, %v36
    %v45 = vand.u32 %v44, 8388607
    %v46 = vor.u32 %v45, 8388608
    %v47 = vsub.s32 0, %v46
    %v48 = vadd.s32 %v43, 1
    %vm49 = vcmp.gt.s32.totalorder %v48, 0
    %v50 = vsel %vm49, %v48, 0
    %v51 = vshrl.u32 %v50, 5
    %v52 = vand.u32 %v50, 31
    %v53 = vsub.s32 32, %v52
    %v54 = vshrl.u32 683565275, %v53
    %v55 = vshll.u32 683565275, %v52
    %v56 = vshrl.u32 2475754826, %v53
    %v57 = vor.u32 %v55, %v56
    %v58 = vshll.u32 2475754826, %v52
    %v59 = vshrl.u32 2131351028, %v53
    %v60 = vor.u32 %v58, %v59
    %v61 = vshll.u32 2131351028, %v52
    %v62 = vshrl.u32 2102212464, %v53
    %v63 = vor.u32 %v61, %v62
    %v64 = vshll.u32 2102212464, %v52
    %v65 = vshrl.u32 920167782, %v53
    %v66 = vor.u32 %v64, %v65
    %v67 = vshll.u32 920167782, %v52
    %v68 = vshrl.u32 1326507024, %v53
    %v69 = vor.u32 %v67, %v68
    %vm70 = vcmp.lt.s32.totalorder %v51, 1
    %vm71 = vcmp.lt.s32.totalorder %v51, 2
    %vm72 = vcmp.lt.s32.totalorder %v51, 3
    %vm73 = vcmp.lt.s32.totalorder %v51, 4
    %v74 = vsel %vm70, %v54, %v57
    %v75 = vsel %vm73, %v63, 2102212464
    %v76 = vsel %vm72, %v60, %v75
    %v77 = vsel %vm71, %v74, %v76
    %v78 = vsel %vm70, %v57, %v60
    %v79 = vsel %vm73, %v66, 920167782
    %v80 = vsel %vm72, %v63, %v79
    %v81 = vsel %vm71, %v78, %v80
    %v82 = vsel %vm70, %v60, %v63
    %v83 = vsel %vm73, %v69, 1326507024
    %v84 = vsel %vm72, %v66, %v83
    %v85 = vsel %vm71, %v82, %v84
    %v86 = vshll.u32 %v46, 8
    %v87 = vmul.u32.u64.compose %v86, %v85
    %v88 = vextract.low.u32 %v87
    %v89 = vextract.high.u32 %v87
    %v90 = vmul.u32.u64.compose %v86, %v81
    %v91 = vextract.low.u32 %v90
    %v92 = vextract.high.u32 %v90
    %v93 = vmul.u32 %v86, %v77
    %v94 = vadd.s32 %v89, %v91
    %vm95 = vc.u32 %v89, %v91
    %v96 = vadd.s32 %v92, 1
    %v97 = vsel %vm95, %v96, %v92
    %v98 = vadd.s32 %v93, %v97
    %v99 = vadd.s32 %v98, 536870912
    %v100 = vshrl.u32 %v99, 30
    %v101 = vshll.u32 %v100, 30
    %v102 = vsub.s32 %v98, %v101
    %vm103 = vcmp.lt.s32.totalorder %v102, 0
    %v104 = vsub.s32 0, %v102
    %v105 = vsel %vm103, %v104, %v102
    %v106 = vclz %v105
    %v107 = vsub.s32 %v106, 2
    %vm108 = vcmp.gt.s32.totalorder 0, %v107
    %v109 = vsel %vm108, 0, %v107
    %v110 = vsub.s32 32, %v109
    %v111 = vshll.u32 %v102, %v109
    %v112 = vshrl.u32 %v94, %v110
    %v113 = vor.u32 %v111, %v112
    %v114 = vsub.s32 4294967266, %v109
    %v115 = vadd.s32 %v114, 127
    %v116 = vshll.u32 %v115, 23
    %v117 = vor.u32 4788187, %v116
    %v118 = vand.u32 2147483647, %v117
    %v120 = vcvt.s32.f32 %v113
    %v121 = vmul.f32 %v120, %v118
    %v122 = vxor.u32 %v121, 2147483648
    %v123 = vsel %vm40, %v122, %v121
    %v124 = vsub.s32 4, %v100
    %v125 = vsel %vm40, %v124, %v100
    %v126 = vsel %vm39, %v36, %v123
    %v127 = vsel %vm39, 0, %v125
    %v128 = vcosq.f32.pop %v126
    %v129 = vsinq.f32.pop %v126
    %vm130 = vweird.f32 %v36
    %v131 = vand.u32 %v127, 3
    %vm132 = vcmp.lt.s32.totalorder %v131, 2
    %vm133 = vcmp.eq.s32.totalorder %v131, 0
    %v134 = vxor.u32 %v129, 2147483648
    %v135 = vsel %vm133, %v128, %v134
    %vm136 = vcmp.eq.s32.totalorder %v131, 2
    %v137 = vxor.u32 %v128, 2147483648
    %v138 = vsel %vm136, %v137, %v129
    %v139 = vsel %vm132, %v135, %v138
    %v140 = vsel %vm130, nan, %v139
    %v141 = vand.u32 2147483647, %v37
    %vm142 = vcmp.le.f32.partialorder %v141, 0.7853982
    %vm143 = vcmp.lt.s32.totalorder %v37, 0
    %v144 = vand.u32 %v37, 2139095040
    %v145 = vshrl.u32 %v144, 23
    %v146 = vsub.s32 %v145, 127
    %v147 = vand.u32 2147483647, %v37
    %v148 = vand.u32 %v147, 8388607
    %v149 = vor.u32 %v148, 8388608
    %v150 = vsub.s32 0, %v149
    %v151 = vadd.s32 %v146, 1
    %vm152 = vcmp.gt.s32.totalorder %v151, 0
    %v153 = vsel %vm152, %v151, 0
    %v154 = vshrl.u32 %v153, 5
    %v155 = vand.u32 %v153, 31
    %v156 = vsub.s32 32, %v155
    %v157 = vshrl.u32 683565275, %v156
    %v158 = vshll.u32 683565275, %v155
    %v159 = vshrl.u32 2475754826, %v156
    %v160 = vor.u32 %v158, %v159
    %v161 = vshll.u32 2475754826, %v155
    %v162 = vshrl.u32 2131351028, %v156
    %v163 = vor.u32 %v161, %v162
    %v164 = vshll.u32 2131351028, %v155
    %v165 = vshrl.u32 2102212464, %v156
    %v166 = vor.u32 %v164, %v165
    %v167 = vshll.u32 2102212464, %v155
    %v168 = vshrl.u32 920167782, %v156
    %v169 = vor.u32 %v167, %v168
    %v170 = vshll.u32 920167782, %v155
    %v171 = vshrl.u32 1326507024, %v156
    %v172 = vor.u32 %v170, %v171
    %vm173 = vcmp.lt.s32.totalorder %v154, 1
    %vm174 = vcmp.lt.s32.totalorder %v154, 2
    %vm175 = vcmp.lt.s32.totalorder %v154, 3
    %vm176 = vcmp.lt.s32.totalorder %v154, 4
    %v177 = vsel %vm173, %v157, %v160
    %v178 = vsel %vm176, %v166, 2102212464
    %v179 = vsel %vm175, %v163, %v178
    %v180 = vsel %vm174, %v177, %v179
    %v181 = vsel %vm173, %v160, %v163
    %v182 = vsel %vm176, %v169, 920167782
    %v183 = vsel %vm175, %v166, %v182
    %v184 = vsel %vm174, %v181, %v183
    %v185 = vsel %vm173, %v163, %v166
    %v186 = vsel %vm176, %v172, 1326507024
    %v187 = vsel %vm175, %v169, %v186
    %v188 = vsel %vm174, %v185, %v187
    %v189 = vshll.u32 %v149, 8
    %v190 = vmul.u32.u64.compose %v189, %v188
    %v191 = vextract.low.u32 %v190
    %v192 = vextract.high.u32 %v190
    %v193 = vmul.u32.u64.compose %v189, %v184
    %v194 = vextract.low.u32 %v193
    %v195 = vextract.high.u32 %v193
    %v196 = vmul.u32 %v189, %v180
    %v197 = vadd.s32 %v192, %v194
    %vm198 = vc.u32 %v192, %v194
    %v199 = vadd.s32 %v195, 1
    %v200 = vsel %vm198, %v199, %v195
    %v201 = vadd.s32 %v196, %v200
    %v202 = vadd.s32 %v201, 536870912
    %v203 = vshrl.u32 %v202, 30
    %v204 = vshll.u32 %v203, 30
    %v205 = vsub.s32 %v201, %v204
    %vm206 = vcmp.lt.s32.totalorder %v205, 0
    %v207 = vsub.s32 0, %v205
    %v208 = vsel %vm206, %v207, %v205
    %v209 = vclz %v208
    %v210 = vsub.s32 %v209, 2
    %vm211 = vcmp.gt.s32.totalorder 0, %v210
    %v212 = vsel %vm211, 0, %v210
    %v213 = vsub.s32 32, %v212
    %v214 = vshll.u32 %v205, %v212
    %v215 = vshrl.u32 %v197, %v213
    %v216 = vor.u32 %v214, %v215
    %v217 = vsub.s32 4294967266, %v212
    %v218 = vadd.s32 %v217, 127
    %v219 = vshll.u32 %v218, 23
    %v220 = vor.u32 4788187, %v219
    %v221 = vand.u32 2147483647, %v220
    %v223 = vcvt.s32.f32 %v216
    %v224 = vmul.f32 %v223, %v221
    %v225 = vxor.u32 %v224, 2147483648
    %v226 = vsel %vm143, %v225, %v224
    %v227 = vsub.s32 4, %v203
    %v228 = vsel %vm143, %v227, %v203
    %v229 = vsel %vm142, %v37, %v226
    %v230 = vsel %vm142, 0, %v228
    %v231 = vcosq.f32.pop %v229
    %v232 = vsinq.f32.pop %v229
    %vm233 = vweird.f32 %v37
    %v234 = vand.u32 %v230, 3
    %vm235 = vcmp.lt.s32.totalorder %v234, 2
    %vm236 = vcmp.eq.s32.totalorder %v234, 0
    %v237 = vxor.u32 %v232, 2147483648
    %v238 = vsel %vm236, %v231, %v237
    %vm239 = vcmp.eq.s32.totalorder %v234, 2
    %v240 = vxor.u32 %v231, 2147483648
    %v241 = vsel %vm239, %v240, %v232
    %v242 = vsel %vm235, %v238, %v241
    %v243 = vsel %vm233, nan, %v242
    %v244 = vand.u32 2147483647, %v36
    %vm245 = vcmp.le.f32.partialorder %v244, 0.7853982
    %vm246 = vcmp.lt.s32.totalorder %v36, 0
    %v247 = vand.u32 %v36, 2139095040
    %v248 = vshrl.u32 %v247, 23
    %v249 = vsub.s32 %v248, 127
    %v250 = vand.u32 2147483647, %v36
    %v251 = vand.u32 %v250, 8388607
    %v252 = vor.u32 %v251, 8388608
    %v253 = vsub.s32 0, %v252
    %v254 = vadd.s32 %v249, 1
    %vm255 = vcmp.gt.s32.totalorder %v254, 0
    %v256 = vsel %vm255, %v254, 0
    %v257 = vshrl.u32 %v256, 5
    %v258 = vand.u32 %v256, 31
    %v259 = vsub.s32 32, %v258
    %v260 = vshrl.u32 683565275, %v259
    %v261 = vshll.u32 683565275, %v258
    %v262 = vshrl.u32 2475754826, %v259
    %v263 = vor.u32 %v261, %v262
    %v264 = vshll.u32 2475754826, %v258
    %v265 = vshrl.u32 2131351028, %v259
    %v266 = vor.u32 %v264, %v265
    %v267 = vshll.u32 2131351028, %v258
    %v268 = vshrl.u32 2102212464, %v259
    %v269 = vor.u32 %v267, %v268
    %v270 = vshll.u32 2102212464, %v258
    %v271 = vshrl.u32 920167782, %v259
    %v272 = vor.u32 %v270, %v271
    %v273 = vshll.u32 920167782, %v258
    %v274 = vshrl.u32 1326507024, %v259
    %v275 = vor.u32 %v273, %v274
    %vm276 = vcmp.lt.s32.totalorder %v257, 1
    %vm277 = vcmp.lt.s32.totalorder %v257, 2
    %vm278 = vcmp.lt.s32.totalorder %v257, 3
    %vm279 = vcmp.lt.s32.totalorder %v257, 4
    %v280 = vsel %vm276, %v260, %v263
    %v281 = vsel %vm279, %v269, 2102212464
    %v282 = vsel %vm278, %v266, %v281
    %v283 = vsel %vm277, %v280, %v282
    %v284 = vsel %vm276, %v263, %v266
    %v285 = vsel %vm279, %v272, 920167782
    %v286 = vsel %vm278, %v269, %v285
    %v287 = vsel %vm277, %v284, %v286
    %v288 = vsel %vm276, %v266, %v269
    %v289 = vsel %vm279, %v275, 1326507024
    %v290 = vsel %vm278, %v272, %v289
    %v291 = vsel %vm277, %v288, %v290
    %v292 = vshll.u32 %v252, 8
    %v293 = vmul.u32.u64.compose %v292, %v291
    %v294 = vextract.low.u32 %v293
    %v295 = vextract.high.u32 %v293
    %v296 = vmul.u32.u64.compose %v292, %v287
    %v297 = vextract.low.u32 %v296
    %v298 = vextract.high.u32 %v296
    %v299 = vmul.u32 %v292, %v283
    %v300 = vadd.s32 %v295, %v297
    %vm301 = vc.u32 %v295, %v297
    %v302 = vadd.s32 %v298, 1
    %v303 = vsel %vm301, %v302, %v298
    %v304 = vadd.s32 %v299, %v303
    %v305 = vadd.s32 %v304, 536870912
    %v306 = vshrl.u32 %v305, 30
    %v307 = vshll.u32 %v306, 30
    %v308 = vsub.s32 %v304, %v307
    %vm309 = vcmp.lt.s32.totalorder %v308, 0
    %v310 = vsub.s32 0, %v308
    %v311 = vsel %vm309, %v310, %v308
    %v312 = vclz %v311
    %v313 = vsub.s32 %v312, 2
    %vm314 = vcmp.gt.s32.totalorder 0, %v313
    %v315 = vsel %vm314, 0, %v313
    %v316 = vsub.s32 32, %v315
    %v317 = vshll.u32 %v308, %v315
    %v318 = vshrl.u32 %v300, %v316
    %v319 = vor.u32 %v317, %v318
    %v320 = vsub.s32 4294967266, %v315
    %v321 = vadd.s32 %v320, 127
    %v322 = vshll.u32 %v321, 23
    %v323 = vor.u32 4788187, %v322
    %v324 = vand.u32 2147483647, %v323
    %v326 = vcvt.s32.f32 %v319
    %v327 = vmul.f32 %v326, %v324
    %v328 = vxor.u32 %v327, 2147483648
    %v329 = vsel %vm246, %v328, %v327
    %v330 = vsub.s32 4, %v306
    %v331 = vsel %vm246, %v330, %v306
    %v332 = vsel %vm245, %v36, %v329
    %v333 = vsel %vm245, 0, %v331
    %v334 = vcosq.f32.pop %v332
    %v335 = vsinq.f32.pop %v332
    %vm336 = vweird.f32 %v36
    %v337 = vadd.s32 %v333, 3
    %v338 = vand.u32 %v337, 3
    %vm339 = vcmp.lt.s32.totalorder %v338, 2
    %vm340 = vcmp.eq.s32.totalorder %v338, 0
    %v341 = vxor.u32 %v335, 2147483648
    %v342 = vsel %vm340, %v334, %v341
    %vm343 = vcmp.eq.s32.totalorder %v338, 2
    %v344 = vxor.u32 %v334, 2147483648
    %v345 = vsel %vm343, %v344, %v335
    %v346 = vsel %vm339, %v342, %v345
    %v347 = vsel %vm336, nan, %v346
    %v348 = vand.u32 2147483647, %v37
    %vm349 = vcmp.le.f32.partialorder %v348, 0.7853982
    %vm350 = vcmp.lt.s32.totalorder %v37, 0
    %v351 = vand.u32 %v37, 2139095040
    %v352 = vshrl.u32 %v351, 23
    %v353 = vsub.s32 %v352, 127
    %v354 = vand.u32 2147483647, %v37
    %v355 = vand.u32 %v354, 8388607
    %v356 = vor.u32 %v355, 8388608
    %v357 = vsub.s32 0, %v356
    %v358 = vadd.s32 %v353, 1
    %vm359 = vcmp.gt.s32.totalorder %v358, 0
    %v360 = vsel %vm359, %v358, 0
    %v361 = vshrl.u32 %v360, 5
    %v362 = vand.u32 %v360, 31
    %v363 = vsub.s32 32, %v362
    %v364 = vshrl.u32 683565275, %v363
    %v365 = vshll.u32 683565275, %v362
    %v366 = vshrl.u32 2475754826, %v363
    %v367 = vor.u32 %v365, %v366
    %v368 = vshll.u32 2475754826, %v362
    %v369 = vshrl.u32 2131351028, %v363
    %v370 = vor.u32 %v368, %v369
    %v371 = vshll.u32 2131351028, %v362
    %v372 = vshrl.u32 2102212464, %v363
    %v373 = vor.u32 %v371, %v372
    %v374 = vshll.u32 2102212464, %v362
    %v375 = vshrl.u32 920167782, %v363
    %v376 = vor.u32 %v374, %v375
    %v377 = vshll.u32 920167782, %v362
    %v378 = vshrl.u32 1326507024, %v363
    %v379 = vor.u32 %v377, %v378
    %vm380 = vcmp.lt.s32.totalorder %v361, 1
    %vm381 = vcmp.lt.s32.totalorder %v361, 2
    %vm382 = vcmp.lt.s32.totalorder %v361, 3
    %vm383 = vcmp.lt.s32.totalorder %v361, 4
    %v384 = vsel %vm380, %v364, %v367
    %v385 = vsel %vm383, %v373, 2102212464
    %v386 = vsel %vm382, %v370, %v385
    %v387 = vsel %vm381, %v384, %v386
    %v388 = vsel %vm380, %v367, %v370
    %v389 = vsel %vm383, %v376, 920167782
    %v390 = vsel %vm382, %v373, %v389
    %v391 = vsel %vm381, %v388, %v390
    %v392 = vsel %vm380, %v370, %v373
    %v393 = vsel %vm383, %v379, 1326507024
    %v394 = vsel %vm382, %v376, %v393
    %v395 = vsel %vm381, %v392, %v394
    %v396 = vshll.u32 %v356, 8
    %v397 = vmul.u32.u64.compose %v396, %v395
    %v398 = vextract.low.u32 %v397
    %v399 = vextract.high.u32 %v397
    %v400 = vmul.u32.u64.compose %v396, %v391
    %v401 = vextract.low.u32 %v400
    %v402 = vextract.high.u32 %v400
    %v403 = vmul.u32 %v396, %v387
    %v404 = vadd.s32 %v399, %v401
    %vm405 = vc.u32 %v399, %v401
    %v406 = vadd.s32 %v402, 1
    %v407 = vsel %vm405, %v406, %v402
    %v408 = vadd.s32 %v403, %v407
    %v409 = vadd.s32 %v408, 536870912
    %v410 = vshrl.u32 %v409, 30
    %v411 = vshll.u32 %v410, 30
    %v412 = vsub.s32 %v408, %v411
    %vm413 = vcmp.lt.s32.totalorder %v412, 0
    %v414 = vsub.s32 0, %v412
    %v415 = vsel %vm413, %v414, %v412
    %v416 = vclz %v415
    %v417 = vsub.s32 %v416, 2
    %vm418 = vcmp.gt.s32.totalorder 0, %v417
    %v419 = vsel %vm418, 0, %v417
    %v420 = vsub.s32 32, %v419
    %v421 = vshll.u32 %v412, %v419
    %v422 = vshrl.u32 %v404, %v420
    %v423 = vor.u32 %v421, %v422
    %v424 = vsub.s32 4294967266, %v419
    %v425 = vadd.s32 %v424, 127
    %v426 = vshll.u32 %v425, 23
    %v427 = vor.u32 4788187, %v426
    %v428 = vand.u32 2147483647, %v427
    %v430 = vcvt.s32.f32 %v423
    %v431 = vmul.f32 %v430, %v428
    %v432 = vxor.u32 %v431, 2147483648
    %v433 = vsel %vm350, %v432, %v431
    %v434 = vsub.s32 4, %v410
    %v435 = vsel %vm350, %v434, %v410
    %v436 = vsel %vm349, %v37, %v433
    %v437 = vsel %vm349, 0, %v435
    %v438 = vcosq.f32.pop %v436
    %v439 = vsinq.f32.pop %v436
    %vm440 = vweird.f32 %v37
    %v441 = vadd.s32 %v437, 3
    %v442 = vand.u32 %v441, 3
    %vm443 = vcmp.lt.s32.totalorder %v442, 2
    %vm444 = vcmp.eq.s32.totalorder %v442, 0
    %v445 = vxor.u32 %v439, 2147483648
    %v446 = vsel %vm444, %v438, %v445
    %vm447 = vcmp.eq.s32.totalorder %v442, 2
    %v448 = vxor.u32 %v438, 2147483648
    %v449 = vsel %vm447, %v448, %v439
    %v450 = vsel %vm443, %v446, %v449
    %v451 = vsel %vm440, nan, %v450
    %vm452 = vcmask 261120
    %453 = vst.msk [vmem:[#allocation2] sm:$0xff] %vm452, %v140
    %454 = vst.msk [vmem:[#allocation2 + $0x8] sm:$0xff] %vm452, %v243
    %455 = vst.msk [vmem:[#allocation4] sm:$0xff] %vm452, %v347
    %456 = vst.msk [vmem:[#allocation4 + $0x8] sm:$0xff] %vm452, %v451
    // Predicated region
    $region10: #{tpu_custom_call.1} parent=1 // pred_check
      _
    $region11: #{tpu_custom_call.1} parent=1 // pred_check_branch
      %458 = sbr.rel (0) target = $region13
    $region12: #{tpu_custom_call.1} parent=1 // pred_region
      %s460 = ssub.s32 256, 256
      %461 = vsyncadd [#allocation3], %s460
      %s462 = sshll.u32 [#allocation2], 4
      %s463 = int_to_ptr.vmem [resolvable:$true] %s462
      %468 = dma.vmem_to_hbm [thread:$0]  %s463, 256, %s2, [#allocation3], 128, 128, 8
    $region13: #{tpu_custom_call.1} parent=1 // pred_fallthru
      _
    // Predicated region
    $region14: #{tpu_custom_call.1} parent=1 // pred_check
      _
    $region15: #{tpu_custom_call.1} parent=1 // pred_check_branch
      %470 = sbr.rel (0) target = $region17
    $region16: #{tpu_custom_call.1} parent=1 // pred_region
      %s472 = ssub.s32 256, 256
      %473 = vsyncadd [#allocation5], %s472
      %s474 = sshll.u32 [#allocation4], 4
      %s475 = int_to_ptr.vmem [resolvable:$true] %s474
      %480 = dma.vmem_to_hbm [thread:$0]  %s475, 256, %s3, [#allocation5], 128, 128, 8
    $region17: #{tpu_custom_call.1} parent=1 // pred_fallthru
      _
    // Predicated region
    $region18: #{tpu_custom_call.1} parent=1 // pred_check
      _
    $region19: #{tpu_custom_call.1} parent=1 // pred_check_branch
      %482 = sbr.rel (0) target = $region21
    $region20: #{tpu_custom_call.1} parent=1 // pred_region
      %483 = dma.done [#allocation3], 256
    $region21: #{tpu_custom_call.1} parent=1 // pred_fallthru
      _
    // Predicated region
    $region22: #{tpu_custom_call.1} parent=1 // pred_check
      _
    $region23: #{tpu_custom_call.1} parent=1 // pred_check_branch
      %485 = sbr.rel (0) target = $region25
    $region24: #{tpu_custom_call.1} parent=1 // pred_region
      %486 = dma.done [#allocation5], 256
    $region25: #{tpu_custom_call.1} parent=1 // pred_fallthru
      _
    %487 = vsyncpa [#allocation3], 1
    %488 = vsyncpa [#allocation5], 1

</llo_original>
